<compile_context>
chip_gen: v7x
topology: tpu7x:2x2x1
jax: 0.10.0
libtpu: 0.0.40
codegen_flags: <defaults>
</compile_context>

<pallas_src>
import jax
import jax.numpy as jnp
from jax.experimental import pallas as pl
from jax.experimental.pallas import tpu as pltpu


def skipnet_kernel(x_ref, w_ref, b_ref, o_ref):
    # x_ref: (TILE_B, IN) in x's native dtype -- the only real HBM stream
    # w_ref: (1, IN)      same dtype, grid-invariant / resident
    # b_ref: (1,)         f32 scalar bias in SMEM
    # o_ref: (1, TILE_B)  f32, lane-dense output row
    #
    # (1, IN) . (TILE_B, IN)^T -> (1, TILE_B): single MXU pass, f32 accumulation,
    # no materialized elementwise product, lane-dense result (no relayout needed).
    y = jax.lax.dot_general(
        w_ref[...], x_ref[...],
        dimension_numbers=(((1,), (1,)), ((), ())),
        preferred_element_type=jnp.float32,
    ) + b_ref[0]
    # sigmoid(y) = 1 / (1 + exp(-y)); exp + approx reciprocal both land on the EUP
    # slot and hide under the x DMA.
    o_ref[...] = pl.reciprocal(1.0 + jnp.exp(-y), approx=True).astype(o_ref.dtype)


def _vmem_cap_bytes():
    """Physical VMEM of this generation (v5e/v6e: 128 MiB, v7x: 64 MiB)."""
    try:
        return int(pltpu.get_tpu_info().vmem_capacity_bytes)
    except Exception:
        return 64 << 20   # smallest per-TC VMEM across supported generations


def _choose_tile_b(batch, in_planes, itemsize, per_buffer_budget_bytes=8 << 20):
    """Rows per grid step.

    * Cap by per-buffer BYTES (x is double-buffered), so each step moves ~8 MiB
      regardless of in_planes (no fixed row cap starving small-in_planes cases).
    * Multiples of 128 when tiling, so the lane-dense (1, tile_b) output blocks
      satisfy the (8, 128) rule (and bf16's 16-row sublane packing for x).
    * Keep >= 2 tiles on large batches so v7x's two TensorCores both issue DMAs.
    """
    batch = int(batch)
    in_planes = max(int(in_planes), 1)
    rows = per_buffer_budget_bytes // (max(int(itemsize), 1) * in_planes)
    rows = max(128, (rows // 128) * 128)
    if rows < batch:
        return rows                                   # streaming, multi-tile case
    if batch >= 256:                                  # one tile would swallow the batch:
        half = -(-batch // 2)                         #   force >= 2 tiles (v7x megacore)
        return ((half + 127) // 128) * 128
    return batch                                      # tiny batch: single full-array block


def skipnet_forward(x, weight, bias, *, tile_b=None):
    """x: (B, in_planes); weight: (out_planes, in_planes); bias: (out_planes,)."""
    B, in_planes = x.shape
    out_planes, in_planes_w = weight.shape
    assert in_planes_w == in_planes
    assert out_planes == 1, "SkipNet's .view(B, 1) requires out_planes == 1"

    # Stream x in its NATIVE dtype (no extra HBM pass).  Weight/bias casts are tiny.
    w = weight.reshape(1, in_planes).astype(x.dtype)
    b = bias.astype(jnp.float32).reshape((1,))

    itemsize = jnp.dtype(x.dtype).itemsize
    if tile_b is None:
        tile_b = _choose_tile_b(B, in_planes, itemsize)
    else:
        tile_b = int(tile_b)
        if tile_b < B:
            tile_b = ((tile_b + 127) // 128) * 128    # lane-dense out blocks need %128
        if tile_b >= B:
            tile_b = B                                # single full-array block
    num_tiles = int(pl.cdiv(B, tile_b))
    out_cols = num_tiles * tile_b                     # padded lane-dense slab (tiny)

    # Scoped VMEM: double-buffered x stream + resident weight + f32 output blocks
    # (padded to 8 sublanes) + headroom for the f32 matmul/sigmoid temporaries.
    vmem_need = (2 * tile_b * in_planes * itemsize
                 + 2 * in_planes * itemsize
                 + 2 * 8 * tile_b * 4
                 + 4 * 8 * tile_b * 4)
    vmem_limit = int(min(max(vmem_need + (4 << 20), 32 << 20), _vmem_cap_bytes()))

    out = pl.pallas_call(
        skipnet_kernel,
        out_shape=jax.ShapeDtypeStruct((1, out_cols), jnp.float32),
        grid=(num_tiles,),
        in_specs=[
            pl.BlockSpec((tile_b, in_planes), lambda i: (i, 0)),    # streamed x (native dtype)
            pl.BlockSpec((1, in_planes), lambda i: (0, 0)),         # resident weight row
            pl.BlockSpec(memory_space=pltpu.MemorySpace.SMEM),      # scalar bias
        ],
        out_specs=pl.BlockSpec((1, tile_b), lambda i: (0, i)),      # lane-dense output row
        compiler_params=pltpu.CompilerParams(
            dimension_semantics=("parallel",),       # batch tiles independent (v7x megacore)
            vmem_limit_bytes=vmem_limit,
        ),
    )(x, w, b)

    # (1, num_tiles * tile_b) -> (B, 1); the slice drops the padded tail rows.
    return out.reshape(-1)[:B].reshape(B, 1).astype(x.dtype)


if __name__ == "__main__":
    key = jax.random.PRNGKey(0)
    k1, k2, k3, k4, k5 = jax.random.split(key, 5)

    def ref_sigmoid_linear(x, w, b):
        xf, wf, bf = (a.astype(jnp.float32) for a in (x, w, b))
        return jax.nn.sigmoid(xf @ wf.T + bf).reshape(x.shape[0], 1)

    # Case 1: tiny f32 SkipNet (B=8, in_planes=32) -- single full-array block.
    B1, IN1 = 8, 32
    bound1 = 1.0 / (IN1 ** 0.5)
    x1 = jax.random.normal(k1, (B1, IN1), dtype=jnp.float32)
    w1 = jax.random.uniform(k2, (1, IN1), minval=-bound1, maxval=bound1, dtype=jnp.float32)
    b1 = jax.random.uniform(k3, (1,), minval=-bound1, maxval=bound1, dtype=jnp.float32)
    out1 = jax.block_until_ready(skipnet_forward(x1, w1, b1))
    assert out1.shape == (B1, 1)
    assert jnp.allclose(out1, ref_sigmoid_linear(x1, w1, b1), atol=5e-3, rtol=5e-3)

    # Case 2: f32, B=200, in_planes=64, tile_b=128 -> 2 pipelined grid steps with a
    # partial final x block (no wrapper-side padding) and lane-dense output rows.
    B2, IN2 = 200, 64
    bound2 = 1.0 / (IN2 ** 0.5)
    x2 = jax.random.normal(k4, (B2, IN2), dtype=jnp.float32)
    w2 = jax.random.uniform(k2, (1, IN2), minval=-bound2, maxval=bound2, dtype=jnp.float32)
    b2 = jax.random.uniform(k3, (1,), minval=-bound2, maxval=bound2, dtype=jnp.float32)
    out2 = jax.block_until_ready(skipnet_forward(x2, w2, b2, tile_b=128))
    assert out2.shape == (B2, 1)
    assert jnp.allclose(out2, ref_sigmoid_linear(x2, w2, b2), atol=5e-3, rtol=5e-3)

    # Case 3: bf16 streamed in its native dtype (no wrapper upcast), f32 MXU accum.
    B3, IN3 = 16, 32
    bound3 = 1.0 / (IN3 ** 0.5)
    x3 = jax.random.normal(k5, (B3, IN3), dtype=jnp.float32).astype(jnp.bfloat16)
    w3 = jax.random.uniform(k2, (1, IN3), minval=-bound3, maxval=bound3,
                            dtype=jnp.float32).astype(jnp.bfloat16)
    b3 = jax.random.uniform(k3, (1,), minval=-bound3, maxval=bound3, dtype=jnp.float32)
    out3 = jax.block_until_ready(skipnet_forward(x3, w3, b3))
    assert out3.shape == (B3, 1)
    assert jnp.allclose(out3.astype(jnp.float32), ref_sigmoid_linear(x3, w3, b3),
                        atol=2e-2, rtol=2e-2)

    print("KERNEL_OK")
</pallas_src>

<mosaic_0001>
module attributes {stable_mosaic.version = 11 : i64} {
  func.func @skipnet_kernel(%arg0: i32, %arg1: memref<8x32xf32, #tpu.memory_space<vmem>>, %arg2: memref<1x32xf32, #tpu.memory_space<vmem>>, %arg3: memref<1xf32, #tpu.memory_space<smem>>, %arg4: memref<1x8xf32, #tpu.memory_space<vmem>>) attributes {dimension_semantics = [#tpu.dimension_semantics<parallel>], iteration_bounds = array<i64: 1>, scalar_prefetch = 0 : i64, scratch_operands = 0 : i64, tpu.core_type = #tpu.core_type<tc>, window_params = [{transform_indices = @transform_0, window_bounds = array<i64: 8, 32>}, {pipeline_mode = #tpu.pipeline_mode<synchronous>, transform_indices = @transform_1, window_bounds = array<i64: 1, 32>}, {transform_indices = @transform_2, window_bounds = array<i64: 1>}, {transform_indices = @transform_3, window_bounds = array<i64: 1, 8>}]} {
    %c0 = arith.constant 0 : index
    %c0_0 = arith.constant 0 : index
    %0 = vector.load %arg2[%c0, %c0_0] : memref<1x32xf32, #tpu.memory_space<vmem>>, vector<1x32xf32>
    %c0_1 = arith.constant 0 : index
    %c0_2 = arith.constant 0 : index
    %1 = vector.load %arg1[%c0_1, %c0_2] : memref<8x32xf32, #tpu.memory_space<vmem>>, vector<8x32xf32>
    %cst = arith.constant dense<0.000000e+00> : vector<1x8xf32>
    %2 = tpu.matmul %0, %1, %cst {dimension_numbers = #tpu.dot_dimension_numbers<[1], [1], [0], [0], [0, 0, 1, 0], [], []>} : vector<1x32xf32>, vector<8x32xf32>, vector<1x8xf32> -> vector<1x8xf32>
    %c0_3 = arith.constant 0 : index
    %3 = memref.load %arg3[%c0_3] : memref<1xf32, #tpu.memory_space<smem>>
    %4 = vector.broadcast %3 : f32 to vector<1x8xf32>
    %5 = arith.addf %2, %4 : vector<1x8xf32>
    %cst_4 = arith.constant 0.000000e+00 : f32
    %6 = vector.broadcast %cst_4 : f32 to vector<1x8xf32>
    %7 = arith.subf %6, %5 : vector<1x8xf32>
    %8 = math.exp %7 : vector<1x8xf32>
    %cst_5 = arith.constant 1.000000e+00 : f32
    %9 = vector.broadcast %cst_5 : f32 to vector<1x8xf32>
    %10 = arith.addf %9, %8 : vector<1x8xf32>
    %11 = tpu.reciprocal %10 {approx = true} : vector<1x8xf32> -> vector<1x8xf32>
    %c0_6 = arith.constant 0 : index
    %c0_7 = arith.constant 0 : index
    %12 = vector.load %arg4[%c0_6, %c0_7] : memref<1x8xf32, #tpu.memory_space<vmem>>, vector<1x8xf32>
    tpu.vector_store %arg4[%c0_6, %c0_7], %11 {strides = array<i32>} : memref<1x8xf32, #tpu.memory_space<vmem>>, vector<1x8xf32>,
    return
  }
  func.func @transform_0(%arg0: i32) -> (i32, i32) {
    %c0_i32 = arith.constant 0 : i32
    %c0_i32_0 = arith.constant 0 : i32
    return %arg0, %c0_i32 : i32, i32
  }
  func.func @transform_1(%arg0: i32) -> (i32, i32) {
    %c0_i32 = arith.constant 0 : i32
    %c0_i32_0 = arith.constant 0 : i32
    %c0_i32_1 = arith.constant 0 : i32
    return %c0_i32, %c0_i32_0 : i32, i32
  }
  func.func @transform_2(%arg0: i32) -> i32 {
    %c0_i32 = arith.constant 0 : i32
    %c0_i32_0 = arith.constant 0 : i32
    return %c0_i32 : i32
  }
  func.func @transform_3(%arg0: i32) -> (i32, i32) {
    %c0_i32 = arith.constant 0 : i32
    %c0_i32_0 = arith.constant 0 : i32
    return %c0_i32, %arg0 : i32, i32
  }
}

</mosaic_0001>

<llo_original>
// kernel: tpu_custom_call.1
$region0: #{tpu_custom_call.1}
  #allocation0 [shape = 'u32[]', space=smem, size = 0x4, offset = 0x4, fixed_abs, tag = 'smem constant byte address 0x4 - core index']
  #allocation1 [shape = 'u32[144,128]{1,0:T(1,128)}', space=vmem, size = 0x12000, scoped, tag = 'internal scratch']
  #allocation2 [shape = 'f32[1]{0:T(128)S(6)}', space=smem, size = 0x200, scoped, tag = 'scoped memory for tpu_custom_call.1']
  %s0 = inlined_call_operand.hbm [shape: f32[8,32], index: 0, kind: input, shape index: {}]
  %s1 = inlined_call_operand.vmem [shape: f32[1,32], index: 1, kind: input, shape index: {}]
  %s2 = inlined_call_operand.<no memory space> [shape: f32[1], index: 2, kind: input, shape index: {}]
  %s3 = inlined_call_operand.hbm [shape: f32[1,8], index: 3, kind: output, shape index: {}]
  %s4 = sld [smem:[#allocation0]]
  $region26: #{tpu_custom_call.1} parent=0
    _
  %s6 = ssub.s32 1, %s4
  %s7 = scalar_select 0, %s6, %s4
  %8 = sst [smem:[#allocation2]] %s2
  $region1: #{tpu_custom_call.1} parent=0
    #allocation3 [shape = 'u8[4096]{0}', space=vmem, size = 0x1000, scoped, tag = 'input window, operand 0, single buffered']
    #allocation4 [shape = 's32[1]{0}', space=sflag, size = 0x4, scoped, tag = 'scoped memory for tpu_custom_call.1']
    #allocation5 [shape = 's32[1]{0}', space=sflag, size = 0x4, scoped, tag = 'scoped memory for tpu_custom_call.1']
    #allocation6 [shape = 'u8[512]{0}', space=vmem, size = 0x400, scoped, tag = 'output window, operand 0, single buffered']
    %9 = vsyncpa [#allocation4], 0
    %10 = vsyncpa [#allocation5], 0
    // Predicated region
    $region2: #{tpu_custom_call.1} parent=1 // pred_check
      _
    $region3: #{tpu_custom_call.1} parent=1 // pred_check_branch
      %12 = sbr.rel (0) target = $region5
    $region4: #{tpu_custom_call.1} parent=1 // pred_region
      %s14 = ssub.s32 128, 128
      %15 = vsyncadd [#allocation4], %s14
      %s17 = sshll.u32 [#allocation3], 4
      %s18 = int_to_ptr.vmem [resolvable:$true] %s17
      %20 = dma.hbm_to_vmem [thread:$0]  %s0, 128, %s18, [#allocation4]
    $region5: #{tpu_custom_call.1} parent=1 // pred_fallthru
      _
    // Predicated region
    $region6: #{tpu_custom_call.1} parent=1 // pred_check
      _
    $region7: #{tpu_custom_call.1} parent=1 // pred_check_branch
      %22 = sbr.rel (0) target = $region9
    $region8: #{tpu_custom_call.1} parent=1 // pred_region
      _
    $region9: #{tpu_custom_call.1} parent=1 // pred_fallthru
      _
    // Predicated region
    $region10: #{tpu_custom_call.1} parent=1 // pred_check
      _
    $region11: #{tpu_custom_call.1} parent=1 // pred_check_branch
      %24 = sbr.rel (0) target = $region13
    $region12: #{tpu_custom_call.1} parent=1 // pred_region
      _
    $region13: #{tpu_custom_call.1} parent=1 // pred_fallthru
      _
    // Predicated region
    $region14: #{tpu_custom_call.1} parent=1 // pred_check
      _
    $region15: #{tpu_custom_call.1} parent=1 // pred_check_branch
      %26 = sbr.rel (0) target = $region17
    $region16: #{tpu_custom_call.1} parent=1 // pred_region
      %27 = dma.done [#allocation4], 128
    $region17: #{tpu_custom_call.1} parent=1 // pred_fallthru
      _
    %v28 = vld [vmem:[%s1] sm:$0x1]
    %v29 = vld [vmem:[#allocation3] sm:$0xff]
    %s30 = sld [smem:[#allocation2]]
    %v31 = vstv %s30
    %vm32 = vcmask 261120
    %v34 = vsel %vm32, %v28, 0
    %v37 = vsel %vm32, %v29, 0
    %39 = vmatprep.subr.mxu0 0.0
    %40 = vmatpush1.xpose.msra.mxu0 %v37
    %41 = vmatprep.subr.mxu0 0.0
    %42 = vmatpush1.xpose.msra.mxu0 0.0
    %43 = vmatprep.subr.mxu0 0.0
    %44 = vmatpush1.xpose.msra.mxu0 0.0
    %45 = vmatprep.subr.mxu0 0.0
    %46 = vmatpush1.xpose.msra.mxu0 0.0
    %47 = vmatprep.subr.mxu0 0.0
    %48 = vmatpush1.xpose.msra.mxu0 0.0
    %49 = vmatprep.subr.mxu0 0.0
    %50 = vmatpush1.xpose.msra.mxu0 0.0
    %51 = vmatprep.subr.mxu0 0.0
    %52 = vmatpush1.xpose.msra.mxu0 0.0
    %53 = vmatprep.subr.mxu0 0.0
    %54 = vmatpush1.xpose.msra.mxu0 0.0
    %55 = vmatprep.subr.mxu0 0.0
    %56 = vmatpush1.xpose.msra.mxu0 0.0
    %57 = vmatprep.subr.mxu0 0.0
    %58 = vmatpush1.xpose.msra.mxu0 0.0
    %59 = vmatprep.subr.mxu0 0.0
    %60 = vmatpush1.xpose.msra.mxu0 0.0
    %61 = vmatprep.subr.mxu0 0.0
    %62 = vmatpush1.xpose.msra.mxu0 0.0
    %63 = vmatprep.subr.mxu0 0.0
    %64 = vmatpush1.xpose.msra.mxu0 0.0
    %65 = vmatprep.subr.mxu0 0.0
    %66 = vmatpush1.xpose.msra.mxu0 0.0
    %67 = vmatprep.subr.mxu0 0.0
    %68 = vmatpush1.xpose.msra.mxu0 0.0
    %69 = vmatprep.subr.mxu0 0.0
    %70 = vmatpush1.xpose.msra.mxu0 0.0
    %71 = vmatprep.subr.mxu0 0.0
    %72 = vmatpush1.xpose.msra.mxu0 0.0
    %73 = vmatprep.subr.mxu0 0.0
    %74 = vmatpush1.xpose.msra.mxu0 0.0
    %75 = vmatprep.subr.mxu0 0.0
    %76 = vmatpush1.xpose.msra.mxu0 0.0
    %77 = vmatprep.subr.mxu0 0.0
    %78 = vmatpush1.xpose.msra.mxu0 0.0
    %79 = vmatprep.subr.mxu0 0.0
    %80 = vmatpush1.xpose.msra.mxu0 0.0
    %81 = vmatprep.subr.mxu0 0.0
    %82 = vmatpush1.xpose.msra.mxu0 0.0
    %83 = vmatprep.subr.mxu0 0.0
    %84 = vmatpush1.xpose.msra.mxu0 0.0
    %85 = vmatprep.subr.mxu0 0.0
    %86 = vmatpush1.xpose.msra.mxu0 0.0
    %87 = vmatprep.subr.mxu0 0.0
    %88 = vmatpush1.xpose.msra.mxu0 0.0
    %89 = vmatprep.subr.mxu0 0.0
    %90 = vmatpush1.xpose.msra.mxu0 0.0
    %91 = vmatprep.subr.mxu0 0.0
    %92 = vmatpush1.xpose.msra.mxu0 0.0
    %93 = vmatprep.subr.mxu0 0.0
    %94 = vmatpush1.xpose.msra.mxu0 0.0
    %95 = vmatprep.subr.mxu0 0.0
    %96 = vmatpush1.xpose.msra.mxu0 0.0
    %97 = vmatprep.subr.mxu0 0.0
    %98 = vmatpush1.xpose.msra.mxu0 0.0
    %99 = vmatprep.subr.mxu0 0.0
    %100 = vmatpush1.xpose.msra.mxu0 0.0
    %101 = vmatprep.subr.mxu0 0.0
    %102 = vmatpush1.xpose.msra.mxu0 0.0
    %103 = vmatprep.mubr.f32.mxu0 0.0
    %104 = vmatmul.mubr.f32.gmra.mrb[0].mxu0 %v34
    %v105 = vpop.f32.mrb[0].mxu0
    %v106 = vadd.f32 %v31, %v105
    %v107 = vpop.f32.mrb[0].mxu0
    %108 = vdwg.mxu0
    %v109 = vsub.f32 0.0, %v106
    %v110 = vmul.f32 %v109, 1.442695
    %v111 = vpow.pop %v110
    %v112 = vadd.f32 %v111, 1.0
    %v113 = vrcp.pop %v112
    %vm114 = vcmask 57344
    %115 = vst.msk [vmem:[#allocation6] sm:$0x1] %vm114, %v113
    // Predicated region
    $region18: #{tpu_custom_call.1} parent=1 // pred_check
      _
    $region19: #{tpu_custom_call.1} parent=1 // pred_check_branch
      %117 = sbr.rel (0) target = $region21
    $region20: #{tpu_custom_call.1} parent=1 // pred_region
      %s119 = ssub.s32 16, 16
      %120 = vsyncadd [#allocation5], %s119
      %s122 = sshll.u32 [#allocation6], 4
      %s123 = int_to_ptr.vmem [resolvable:$true] %s122
      %125 = dma.vmem_to_hbm [thread:$0]  %s123, 16, %s3, [#allocation5]
    $region21: #{tpu_custom_call.1} parent=1 // pred_fallthru
      _
    // Predicated region
    $region22: #{tpu_custom_call.1} parent=1 // pred_check
      _
    $region23: #{tpu_custom_call.1} parent=1 // pred_check_branch
      %127 = sbr.rel (0) target = $region25
    $region24: #{tpu_custom_call.1} parent=1 // pred_region
      %128 = dma.done [#allocation5], 16
    $region25: #{tpu_custom_call.1} parent=1 // pred_fallthru
      _
    %129 = vsyncpa [#allocation4], 1
    %130 = vsyncpa [#allocation5], 1

</llo_original>
